<compile_context>
chip_gen: v7x
topology: tpu7x:2x2x1
jax: 0.10.0
libtpu: 0.0.40
codegen_flags: <defaults>
</compile_context>

<pallas_src>
import functools
import math

import jax
import jax.numpy as jnp
from jax import lax
from jax.experimental import pallas as pl
from jax.experimental.pallas import tpu as pltpu

_EPS = 1e-12  # matches F.normalize default eps (clamp applied to the norm)


def _default_exp_in_bf16():
    # bf16 EUP exists on v6e (Trillium) and v7x; not on v5e and older.
    try:
        kind = jax.devices()[0].device_kind.lower()
    except Exception:
        return False
    return any(tag in kind for tag in ("v6", "v7", "tpu7", "trillium"))


def _pick_w_tile(F, C):
    """Class tile for W-normalization: double-buffered f32 input + bf16 output
    blocks (~12*F*TC bytes) kept well under v5e's 16 MiB default scoped VMEM."""
    budget = 6 * 1024 * 1024
    tc = max(128, (budget // (12 * F)) // 128 * 128)
    return C if C <= tc else tc


def _pick_tb_and_vmem(B, F, C, out_itemsize):
    """Batch tile + VMEM limit from a simple live-bytes model.

    Model: resident bf16 W (single buffer) + double-buffered f32 feature blocks
    + double-buffered output blocks + ~4 live (TB, C) f32 epilogue temporaries.
    Budget is conservative so the same config fits v7x (64 MiB physical) as
    well as v5e/v6e (128 MiB)."""
    def live_bytes(tb):
        return (F * C * 2                     # resident wn (bf16, 1 buffer)
                + 2 * tb * F * 4              # x blocks (f32, 2 buffers)
                + 2 * tb * C * out_itemsize   # output blocks (2 buffers)
                + 4 * tb * C * 4)             # live f32 epilogue temporaries

    budget = 44 * 1024 * 1024
    tb = B if B <= 256 else 256
    while 8 < tb < B and live_bytes(tb) > budget:
        tb = max(8, tb // 2)
    if tb < B:
        tb = max(8, (tb // 8) * 8)            # (8, 128) block constraint
    vmem_limit = int(min(48 * 1024 * 1024,
                         max(32 * 1024 * 1024, live_bytes(tb) * 5 // 4)))
    return tb, vmem_limit


# --------------------------------------------------------------------------
# Kernel 1: column-normalize W (dim=0) and cast to bf16, tiled over classes.
# --------------------------------------------------------------------------
def _normalize_w_kernel(w_ref, wn_ref):
    w = w_ref[...].astype(jnp.float32)                        # (F, TC)
    ss = jnp.sum(w * w, axis=0, keepdims=True)                # (1, TC)
    inv = lax.rsqrt(jnp.maximum(ss, _EPS * _EPS))             # 1/max(||col||,eps)
    wn_ref[...] = (w * inv).astype(wn_ref.dtype)


# --------------------------------------------------------------------------
# Kernel 2: main LogArcFace kernel, tiled over the batch axis.
#   a1 = s*cos(m)/10, b = s*sin(m), s1 = s/10  (folded in the wrapper)
# --------------------------------------------------------------------------
def _logarcface_kernel(x_ref, wn_ref, o_ref, *, a1, b, s1, exp_in_bf16):
    x = x_ref[...].astype(jnp.float32)                        # (TB, F)
    ss = jnp.sum(x * x, axis=1, keepdims=True)                # (TB, 1)
    xn = x * lax.rsqrt(jnp.maximum(ss, _EPS * _EPS))          # row-normalized

    # bf16 x bf16 -> f32 on the MXU (operands are unit-norm, bf16 is plenty).
    c = jnp.dot(xn.astype(jnp.bfloat16), wn_ref[...],
                preferred_element_type=jnp.float32)           # (TB, C) = fn@wn

    # exp(s*cos(theta)) = exp(s1*c); class-sum first so fewer temps stay live.
    if exp_in_bf16:
        ect = jnp.exp((s1 * c).astype(jnp.bfloat16)).astype(jnp.float32)
    else:
        ect = jnp.exp(s1 * c)
    row_sum = jnp.sum(ect, axis=1, keepdims=True)             # (TB, 1)

    # sin(theta) = sqrt(1 - u), u = (c/10)^2 <= 0.01 -> degree-3 polynomial
    # (|err| < 1e-9 on that range, avoids the hardware sqrt).
    u = (c * c) * 0.01
    st = 1.0 - u * (0.5 + u * (0.125 + 0.0625 * u))
    log_num = a1 * c - b * st                                 # s*cos(theta+m)
    den = jnp.exp(log_num) + (row_sum - ect)
    o_ref[...] = (log_num - jnp.log(den)).astype(o_ref.dtype)


# --------------------------------------------------------------------------
# Wrapper
# --------------------------------------------------------------------------
def log_arc_face(features, W, margin, scale, *, out_dtype=jnp.float32,
                 exp_in_bf16=None):
    B, F = features.shape
    F2, C = W.shape
    assert F == F2
    if exp_in_bf16 is None:
        exp_in_bf16 = _default_exp_in_bf16()

    # --- hoisted W normalization (one pass over W, emitted as bf16) ---
    TC = _pick_w_tile(F, C)
    wn = pl.pallas_call(
        _normalize_w_kernel,
        out_shape=jax.ShapeDtypeStruct((F, C), jnp.bfloat16),
        grid_spec=pltpu.PrefetchScalarGridSpec(
            num_scalar_prefetch=0,
            grid=(pl.cdiv(C, TC),),
            in_specs=[pl.BlockSpec((F, TC), lambda j: (0, j))],
            out_specs=pl.BlockSpec((F, TC), lambda j: (0, j)),
        ),
        compiler_params=pltpu.CompilerParams(
            dimension_semantics=("parallel",)),
    )(W)

    # --- main kernel, tiled over batch; full class axis per block ---
    out_itemsize = jnp.dtype(out_dtype).itemsize
    TB, vmem_limit = _pick_tb_and_vmem(B, F, C, out_itemsize)

    a1 = float(scale) * math.cos(float(margin)) * 0.1
    b = float(scale) * math.sin(float(margin))
    s1 = float(scale) * 0.1
    kernel = functools.partial(_logarcface_kernel, a1=a1, b=b, s1=s1,
                               exp_in_bf16=bool(exp_in_bf16))

    cost = pl.CostEstimate(
        flops=2 * B * F * C + 16 * B * C,
        transcendentals=3 * B * C + B,          # 2 exp + 1 log per elem + rsqrt
        bytes_accessed=4 * B * F + 2 * F * C + out_itemsize * B * C,
    )

    return pl.pallas_call(
        kernel,
        out_shape=jax.ShapeDtypeStruct((B, C), out_dtype),
        grid_spec=pltpu.PrefetchScalarGridSpec(
            num_scalar_prefetch=0,
            grid=(pl.cdiv(B, TB),),
            in_specs=[
                pl.BlockSpec((TB, F), lambda i: (i, 0)),
                # Resident RHS: block index never changes -> single-buffered.
                pl.BlockSpec((F, C), lambda i: (0, 0),
                             pipeline_mode=pl.Buffered(1)),
            ],
            out_specs=pl.BlockSpec((TB, C), lambda i: (i, 0)),
        ),
        compiler_params=pltpu.CompilerParams(
            dimension_semantics=("parallel",),
            vmem_limit_bytes=vmem_limit),
        cost_estimate=cost,
    )(features, wn)


# --------------------------------------------------------------------------
# References
# --------------------------------------------------------------------------
def log_arc_face_ref(features, W, margin, scale):
    # Literal f32 port of the PyTorch forward (with arccos).
    eps = 1e-12
    fn = features / jnp.maximum(
        jnp.linalg.norm(features, axis=1, keepdims=True), eps)
    wn = W / jnp.maximum(jnp.linalg.norm(W, axis=0, keepdims=True), eps)
    theta = jnp.arccos(jnp.matmul(fn, wn) / 10.0)
    num = jnp.exp(scale * jnp.cos(theta + margin))
    ect = jnp.exp(scale * jnp.cos(theta))
    den = num + (jnp.sum(ect, axis=1, keepdims=True) - ect)
    return jnp.log(num / den)


def log_arc_face_kernel_math_ref(features, W, margin, scale, exp_in_bf16=False):
    # Mirrors the kernel's exact math (bf16 matmul, rsqrt, poly-sqrt, bf16 exp).
    eps = 1e-12
    xn = features * lax.rsqrt(
        jnp.maximum(jnp.sum(features * features, axis=1, keepdims=True),
                    eps * eps))
    wn = (W * lax.rsqrt(
        jnp.maximum(jnp.sum(W * W, axis=0, keepdims=True), eps * eps))
          ).astype(jnp.bfloat16)
    c = jnp.dot(xn.astype(jnp.bfloat16), wn, preferred_element_type=jnp.float32)
    a1 = scale * math.cos(margin) * 0.1
    b = scale * math.sin(margin)
    s1 = scale * 0.1
    if exp_in_bf16:
        ect = jnp.exp((s1 * c).astype(jnp.bfloat16)).astype(jnp.float32)
    else:
        ect = jnp.exp(s1 * c)
    u = (c * c) * 0.01
    st = 1.0 - u * (0.5 + u * (0.125 + 0.0625 * u))
    log_num = a1 * c - b * st
    den = jnp.exp(log_num) + (jnp.sum(ect, axis=1, keepdims=True) - ect)
    return log_num - jnp.log(den)


if __name__ == "__main__":
    feature_nums = 32
    cls_nums = 128
    batch = 8
    margin = 0.5
    scale = 30.0

    key = jax.random.PRNGKey(0)
    k1, k2 = jax.random.split(key)
    features = jax.random.normal(k1, (batch, feature_nums), dtype=jnp.float32)
    # nn.Parameter(torch.randn(feature_nums, cls_nums)) -> deterministic normal init
    W = jax.random.normal(k2, (feature_nums, cls_nums), dtype=jnp.float32)

    exp_in_bf16 = _default_exp_in_bf16()
    out = log_arc_face(features, W, margin, scale, exp_in_bf16=exp_in_bf16)
    out = jax.block_until_ready(out)
    assert out.shape == (batch, cls_nums)
    assert bool(jnp.all(jnp.isfinite(out)))

    # Tight check vs a reference using the kernel's exact math.
    ref_tight = log_arc_face_kernel_math_ref(features, W, margin, scale,
                                             exp_in_bf16=exp_in_bf16)
    tight_atol = 2.5e-2 if exp_in_bf16 else 1e-2
    assert jnp.allclose(out, ref_tight, atol=tight_atol, rtol=2e-3), \
        "mismatch vs kernel-math reference"

    # Looser check vs the literal f32 arccos reference (bf16 MXU / bf16 exp).
    ref = log_arc_face_ref(features, W, margin, scale)
    loose_atol = 8e-2 if exp_in_bf16 else 5e-2
    assert jnp.allclose(out, ref, atol=loose_atol, rtol=5e-3), \
        "mismatch vs literal PyTorch-equivalent reference"

    print("KERNEL_OK")
</pallas_src>

<mosaic_0001>
module attributes {stable_mosaic.version = 11 : i64} {
  func.func @_normalize_w_kernel(%arg0: i32, %arg1: memref<32x128xf32, #tpu.memory_space<vmem>>, %arg2: memref<32x128xbf16, #tpu.memory_space<vmem>>) attributes {dimension_semantics = [#tpu.dimension_semantics<parallel>], iteration_bounds = array<i64: 1>, scalar_prefetch = 0 : i64, scratch_operands = 0 : i64, tpu.core_type = #tpu.core_type<tc>, window_params = [{transform_indices = @transform_0, window_bounds = array<i64: 32, 128>}, {transform_indices = @transform_1, window_bounds = array<i64: 32, 128>}]} {
    %c0 = arith.constant 0 : index
    %c0_0 = arith.constant 0 : index
    %0 = vector.load %arg1[%c0, %c0_0] : memref<32x128xf32, #tpu.memory_space<vmem>>, vector<32x128xf32>
    %1 = arith.mulf %0, %0 : vector<32x128xf32>
    %cst = arith.constant dense<0.000000e+00> : vector<128xf32>
    %2 = vector.multi_reduction <add>, %1, %cst [0] : vector<32x128xf32> to vector<128xf32>
    %3 = vector.shape_cast %2 : vector<128xf32> to vector<1x128xf32>
    %cst_1 = arith.constant 1.000000e-24 : f32
    %4 = vector.broadcast %cst_1 : f32 to vector<1x128xf32>
    %5 = arith.maximumf %3, %4 : vector<1x128xf32>
    %6 = math.rsqrt %5 : vector<1x128xf32>
    %7 = vector.broadcast %6 : vector<1x128xf32> to vector<32x128xf32>
    %8 = arith.mulf %0, %7 : vector<32x128xf32>
    %9 = arith.truncf %8 : vector<32x128xf32> to vector<32x128xbf16>
    %c0_2 = arith.constant 0 : index
    %c0_3 = arith.constant 0 : index
    %10 = vector.load %arg2[%c0_2, %c0_3] : memref<32x128xbf16, #tpu.memory_space<vmem>>, vector<32x128xbf16>
    tpu.vector_store %arg2[%c0_2, %c0_3], %9 {strides = array<i32>} : memref<32x128xbf16, #tpu.memory_space<vmem>>, vector<32x128xbf16>,
    return
  }
  func.func @transform_0(%arg0: i32) -> (i32, i32) {
    %c0_i32 = arith.constant 0 : i32
    %c0_i32_0 = arith.constant 0 : i32
    return %c0_i32, %arg0 : i32, i32
  }
  func.func @transform_1(%arg0: i32) -> (i32, i32) {
    %c0_i32 = arith.constant 0 : i32
    %c0_i32_0 = arith.constant 0 : i32
    return %c0_i32, %arg0 : i32, i32
  }
}

</mosaic_0001>

<llo_original>
// kernel: tpu_custom_call.1
$region0: #{tpu_custom_call.1}
  #allocation0 [shape = 'u32[]', space=smem, size = 0x4, offset = 0x4, fixed_abs, tag = 'smem constant byte address 0x4 - core index']
  #allocation1 [shape = 'u32[144,128]{1,0:T(1,128)}', space=vmem, size = 0x12000, scoped, tag = 'internal scratch']
  %s0 = inlined_call_operand.hbm [shape: f32[32,128], index: 0, kind: input, shape index: {}]
  %s1 = inlined_call_operand.hbm [shape: bf16[32,128], index: 1, kind: output, shape index: {}]
  %s2 = sld [smem:[#allocation0]]
  $region18: #{tpu_custom_call.1} parent=0
    _
  %s4 = ssub.s32 1, %s2
  %s5 = scalar_select 0, %s4, %s2
  $region1: #{tpu_custom_call.1} parent=0
    #allocation2 [shape = 'u8[16384]{0}', space=vmem, size = 0x4000, scoped, tag = 'input window, operand 0, single buffered']
    #allocation3 [shape = 's32[1]{0}', space=sflag, size = 0x4, scoped, tag = 'scoped memory for tpu_custom_call.1']
    #allocation4 [shape = 's32[1]{0}', space=sflag, size = 0x4, scoped, tag = 'scoped memory for tpu_custom_call.1']
    #allocation5 [shape = 'u8[8192]{0}', space=vmem, size = 0x2000, scoped, tag = 'output window, operand 0, single buffered']
    %6 = vsyncpa [#allocation3], 0
    %7 = vsyncpa [#allocation4], 0
    // Predicated region
    $region2: #{tpu_custom_call.1} parent=1 // pred_check
      _
    $region3: #{tpu_custom_call.1} parent=1 // pred_check_branch
      %9 = sbr.rel (0) target = $region5
    $region4: #{tpu_custom_call.1} parent=1 // pred_region
      %s11 = ssub.s32 512, 512
      %12 = vsyncadd [#allocation3], %s11
      %s13 = sshll.u32 [#allocation2], 4
      %s14 = int_to_ptr.vmem [resolvable:$true] %s13
      %19 = dma.hbm_to_vmem [thread:$0]  %s0, 512, %s14, [#allocation3], 128, 128, 8
    $region5: #{tpu_custom_call.1} parent=1 // pred_fallthru
      _
    // Predicated region
    $region6: #{tpu_custom_call.1} parent=1 // pred_check
      _
    $region7: #{tpu_custom_call.1} parent=1 // pred_check_branch
      %21 = sbr.rel (0) target = $region9
    $region8: #{tpu_custom_call.1} parent=1 // pred_region
      %22 = dma.done [#allocation3], 512
    $region9: #{tpu_custom_call.1} parent=1 // pred_fallthru
      _
    %v23 = vld [vmem:[#allocation2] sm:$0xff]
    %v24 = vld [vmem:[#allocation2 + $0x8] sm:$0xff]
    %v25 = vld [vmem:[#allocation2 + $0x10] sm:$0xff]
    %v26 = vld [vmem:[#allocation2 + $0x18] sm:$0xff]
    %v27 = vmul.f32 %v23, %v23
    %v28 = vmul.f32 %v24, %v24
    %v29 = vmul.f32 %v25, %v25
    %v30 = vmul.f32 %v26, %v26
    %v31 = vadd.f32 %v27, %v28
    %v32 = vadd.f32 %v31, %v29
    %v33 = vadd.f32 %v32, %v30
    %v34 = vrot.slane %v33, 4
    %v35 = vadd.f32 %v33, %v34
    %v36 = vrot.slane %v35, 2
    %v37 = vadd.f32 %v35, %v36
    %v38 = vrot.slane %v37, 1
    %v39 = vadd.f32 %v37, %v38
    %v40 = vmax.f32 %v39, 1e-24
    %v41 = vrsqrt.pop %v40
    %v42 = vmul.f32 %v23, %v41
    %v43 = vmul.f32 %v24, %v41
    %v44 = vmul.f32 %v25, %v41
    %v45 = vmul.f32 %v26, %v41
    %v46 = vpack.c.bf16 %v43, %v42
    %v47 = vpack.c.bf16 %v45, %v44
    %v50 = vunpack.c.l.b16 %v46
    %v51 = vunpack.c.h.b16 %v46
    %v52 = vunpack.c.l.b16 %v47
    %v53 = vunpack.c.h.b16 %v47
    %v54 = vpack.c.b16 %v50, %v50
    %v55 = vpack.c.b16 %v51, %v51
    %v56 = vpack.c.b16 %v52, %v52
    %v57 = vpack.c.b16 %v53, %v53
    %62 = vst [vmem:[#allocation5] sm:$0xf] %v54
    %63 = vst [vmem:[#allocation5 + $0x4] sm:$0xf] %v55
    %64 = vst [vmem:[#allocation5 + $0x8] sm:$0xf] %v56
    %65 = vst [vmem:[#allocation5 + $0xc] sm:$0xf] %v57
    // Predicated region
    $region10: #{tpu_custom_call.1} parent=1 // pred_check
      _
    $region11: #{tpu_custom_call.1} parent=1 // pred_check_branch
      %67 = sbr.rel (0) target = $region13
    $region12: #{tpu_custom_call.1} parent=1 // pred_region
      %s69 = ssub.s32 256, 256
      %70 = vsyncadd [#allocation4], %s69
      %s71 = sshll.u32 [#allocation5], 4
      %s72 = int_to_ptr.vmem [resolvable:$true] %s71
      %77 = dma.vmem_to_hbm [thread:$0]  %s72, 256, %s1, [#allocation4], 64, 64, 4
    $region13: #{tpu_custom_call.1} parent=1 // pred_fallthru
      _
    // Predicated region
    $region14: #{tpu_custom_call.1} parent=1 // pred_check
      _
    $region15: #{tpu_custom_call.1} parent=1 // pred_check_branch
      %79 = sbr.rel (0) target = $region17
    $region16: #{tpu_custom_call.1} parent=1 // pred_region
      %80 = dma.done [#allocation4], 256
    $region17: #{tpu_custom_call.1} parent=1 // pred_fallthru
      _
    %81 = vsyncpa [#allocation3], 1
    %82 = vsyncpa [#allocation4], 1

</llo_original>
